<compile_context>
chip_gen: v7x
topology: tpu7x:2x2x1
jax: 0.10.0
libtpu: 0.0.40
codegen_flags: <defaults>
</compile_context>

<pallas_src>
import jax
import jax.numpy as jnp
from jax.experimental import pallas as pl
from jax.experimental.pallas import tpu as pltpu

BN_EPS = 1e-5
LANE = 128


def _arcsinh(y):
    return jnp.log(y + jnp.sqrt(y * y + 1.0))


def _fast_recip(d):
    # approx EUP vrcp + one Newton refinement -> ~f32 accuracy without the full divide chain
    r = pl.reciprocal(d, approx=True)
    return r * (2.0 - d * r)


# ---------------------------------------------------------------------------
# Phase 1: per batch tile -> h = ReLU(normdist2planePP), plus fused BN statistics
# ---------------------------------------------------------------------------
def _phase1_kernel(scal_ref, x_ref, z_ref, rp_ref, h_ref, stats_ref):
    i = pl.program_id(0)
    c = scal_ref[0]

    x = x_ref[...]                                                    # (tb, in_dim), native dtype
    # MXU matmul in the operand dtype (bf16 stays bf16), f32 accumulation.
    xz = jnp.dot(x, z_ref[...], preferred_element_type=jnp.float32)  # (tb, out_p)

    xf = x.astype(jnp.float32)
    x_sqnorm = jnp.sum(xf * xf, axis=-1, keepdims=True)              # (tb, 1)
    cf = 2.0 * _fast_recip(1.0 - c * x_sqnorm)                        # conformal factor

    coef_cosh = rp_ref[0:1, :]    # sqrt(c)/||z|| * cosh(2*sqrt(c)*r)   (1, out_p)
    sinh_r    = rp_ref[1:2, :]    # sinh(2*sqrt(c)*r)                   (1, out_p)
    scale_out = rp_ref[2:3, :]    # 2/sqrt(c) * ||z||                   (1, out_p)

    arg = cf * xz * coef_cosh - (cf - 1.0) * sinh_r
    h = jnp.maximum(scale_out * _arcsinh(arg), 0.0)                   # ReLU(v_k), (tb, out_p)

    h_ref[...] = h

    # Fused single-pass BN statistics, accumulated across batch tiles.
    @pl.when(i == 0)
    def _():
        stats_ref[...] = jnp.zeros_like(stats_ref)

    stats_ref[0:1, :] += jnp.sum(h, axis=0, keepdims=True)
    stats_ref[1:2, :] += jnp.sum(h * h, axis=0, keepdims=True)


# ---------------------------------------------------------------------------
# Phase 2: per batch tile -> BatchNorm (full-batch stats) + lift_map
# ---------------------------------------------------------------------------
def _phase2_kernel(scal_ref, h_ref, stats_ref, o_ref):
    c = scal_ref[0]
    inv_b = scal_ref[1]

    h = h_ref[...]                                                    # (tb, out_p) f32
    mean = stats_ref[0:1, :] * inv_b
    var = jnp.maximum(stats_ref[1:2, :] * inv_b - mean * mean, 0.0)
    inv_std = jax.lax.rsqrt(var + BN_EPS)

    hbn = (h - mean) * inv_std
    sq = jnp.sum(hbn * hbn, axis=-1, keepdims=True)                   # (tb, 1)
    denom = 1.0 + jnp.sqrt(1.0 + c * sq)
    o_ref[...] = (hbn * _fast_recip(denom)).astype(o_ref.dtype)


def _round_up(v, m):
    return (v + m - 1) // m * m


def hyperbolic_poincare(x, z, r, c, *, tile_b=None):
    """x: (B, in_dim); z: (in_dim, out_dim); r: (1, out_dim); c: scalar curvature (>0)."""
    B, in_dim = x.shape
    out_dim = z.shape[1]
    out_p = _round_up(out_dim, LANE)

    if tile_b is None:
        tile_b = B if B <= 256 else 256
    assert B % tile_b == 0 and (tile_b % 8 == 0 or tile_b == B), "pick tile_b dividing B (mult of 8)"
    n_bt = B // tile_b

    # ---- parameter-only constants (depend on (z, r, c), not on x) hoisted out of the kernel ----
    # In a real model these are cached per parameter update; here they are tiny XLA ops.
    cf32 = jnp.float32(c)
    sqrt_c = jnp.sqrt(cf32)
    zf = z.astype(jnp.float32)
    rf = r.astype(jnp.float32)
    # TODO(synk): the reference module has no epsilon on ||z||; a zero column of z is UB there too.
    z_norm = jnp.sqrt(jnp.sum(zf * zf, axis=0, keepdims=True))        # (1, out_dim)
    coef_cosh = sqrt_c / z_norm * jnp.cosh(2.0 * sqrt_c * rf)
    sinh_r = jnp.sinh(2.0 * sqrt_c * rf)
    scale_out = 2.0 / sqrt_c * z_norm
    row_params = jnp.concatenate([coef_cosh, sinh_r, scale_out], axis=0)   # (3, out_dim) f32

    # ---- lane-dense feature axis: zero-pad out_dim to a multiple of 128 ----
    pad = out_p - out_dim
    if pad:
        z_p = jnp.pad(z, ((0, 0), (0, pad)))
        row_params = jnp.pad(row_params, ((0, 0), (0, pad)))
    else:
        z_p = z

    scalars = jnp.array([cf32, 1.0 / B], dtype=jnp.float32)

    cparams1 = pltpu.CompilerParams(
        dimension_semantics=("arbitrary",),          # stats accumulator revisited across tiles
        vmem_limit_bytes=32 * 1024 * 1024,
    )
    cparams2 = pltpu.CompilerParams(
        dimension_semantics=("parallel",),           # independent per batch tile
        vmem_limit_bytes=32 * 1024 * 1024,
    )

    h, stats = pl.pallas_call(
        _phase1_kernel,
        grid=(n_bt,),
        out_shape=(
            jax.ShapeDtypeStruct((B, out_p), jnp.float32),     # h = ReLU(v)
            jax.ShapeDtypeStruct((2, out_p), jnp.float32),     # [sum(h); sum(h^2)]
        ),
        in_specs=[
            pl.BlockSpec(memory_space=pltpu.SMEM),             # scalars (c, 1/B)
            pl.BlockSpec((tile_b, in_dim), lambda i: (i, 0)),  # x batch tile
            pl.BlockSpec((in_dim, out_p), lambda i: (0, 0)),   # z (resident across tiles)
            pl.BlockSpec((3, out_p), lambda i: (0, 0)),        # hoisted row parameters
        ],
        out_specs=(
            pl.BlockSpec((tile_b, out_p), lambda i: (i, 0)),
            pl.BlockSpec((2, out_p), lambda i: (0, 0)),
        ),
        compiler_params=cparams1,
    )(scalars, x, z_p, row_params)

    out_padded = pl.pallas_call(
        _phase2_kernel,
        grid=(n_bt,),
        out_shape=jax.ShapeDtypeStruct((B, out_p), jnp.float32),
        in_specs=[
            pl.BlockSpec(memory_space=pltpu.SMEM),             # scalars (c, 1/B)
            pl.BlockSpec((tile_b, out_p), lambda i: (i, 0)),   # h batch tile
            pl.BlockSpec((2, out_p), lambda i: (0, 0)),        # full-batch stats (resident)
        ],
        out_specs=pl.BlockSpec((tile_b, out_p), lambda i: (i, 0)),
        compiler_params=cparams2,
    )(scalars, h, stats)

    return out_padded[:, :out_dim]


def reference_forward(x, z, r, c):
    """Pure-JAX reference mirroring the PyTorch module (nl=ReLU, BN training mode)."""
    sqrt_c = jnp.sqrt(c)
    cf = 2.0 / (1.0 - c * jnp.sum(x * x, axis=-1, keepdims=True))
    z_norm = jnp.linalg.norm(z, axis=0, keepdims=True)
    zn = z / z_norm
    arg = cf * (sqrt_c * (x @ zn)) * jnp.cosh(2 * sqrt_c * r) - (cf - 1.0) @ jnp.sinh(2 * sqrt_c * r)
    v = 2.0 / sqrt_c * z_norm * jnp.arcsinh(arg)
    h = jax.nn.relu(v)
    mean = jnp.mean(h, axis=0, keepdims=True)
    var = jnp.var(h, axis=0, keepdims=True)
    hbn = (h - mean) / jnp.sqrt(var + BN_EPS)
    return hbn / (1.0 + jnp.sqrt(1.0 + c * jnp.sum(hbn * hbn, axis=-1, keepdims=True)))


if __name__ == "__main__":
    INIT_MEAN = 0.0
    INIT_STD = 0.5
    B, in_dim, out_dim = 32, 32, 16
    c = 1.0  # manifold curvature

    key = jax.random.PRNGKey(0)
    kx, kz, kr = jax.random.split(key, 3)
    # small-norm inputs (points near the Poincare-ball origin)
    x = 0.1 * jax.random.normal(kx, (B, in_dim), dtype=jnp.float32)
    z = INIT_MEAN + INIT_STD * jax.random.normal(kz, (in_dim, out_dim), dtype=jnp.float32)
    r = INIT_MEAN + INIT_STD * jax.random.normal(kr, (1, out_dim), dtype=jnp.float32)

    # tile_b=8 -> 4 batch tiles per phase: exercises the grid, the resident z / row-param
    # blocks, and the cross-tile BN statistics accumulator.
    out = hyperbolic_poincare(x, z, r, c, tile_b=8)
    out = jax.block_until_ready(out)

    ref = reference_forward(x, z, r, jnp.float32(c))
    assert out.shape == (B, out_dim)
    max_err = float(jnp.max(jnp.abs(out - ref)))
    assert jnp.allclose(out, ref, atol=1e-4, rtol=1e-4), f"mismatch vs reference (max abs err {max_err})"

    # TODO(synk): `nl` is a constructor argument in the PyTorch module; ReLU is assumed here.
    # TODO(synk): BatchNorm1d running-mean/var buffer updates (for eval mode) are not modeled.
    print("KERNEL_OK")
</pallas_src>

<mosaic_0001>
module attributes {stable_mosaic.version = 11 : i64} {
  func.func @_phase1_kernel(%arg0: i32, %arg1: memref<2xf32, #tpu.memory_space<smem>>, %arg2: memref<8x32xf32, #tpu.memory_space<vmem>>, %arg3: memref<32x128xf32, #tpu.memory_space<vmem>>, %arg4: memref<3x128xf32, #tpu.memory_space<vmem>>, %arg5: memref<8x128xf32, #tpu.memory_space<vmem>>, %arg6: memref<2x128xf32, #tpu.memory_space<vmem>>) attributes {dimension_semantics = [#tpu.dimension_semantics<arbitrary>], iteration_bounds = array<i64: 4>, scalar_prefetch = 0 : i64, scratch_operands = 0 : i64, tpu.core_type = #tpu.core_type<tc>, window_params = [{transform_indices = @transform_0, window_bounds = array<i64: 2>}, {transform_indices = @transform_1, window_bounds = array<i64: 8, 32>}, {pipeline_mode = #tpu.pipeline_mode<synchronous>, transform_indices = @transform_2, window_bounds = array<i64: 32, 128>}, {pipeline_mode = #tpu.pipeline_mode<synchronous>, transform_indices = @transform_3, window_bounds = array<i64: 3, 128>}, {transform_indices = @transform_4, window_bounds = array<i64: 8, 128>}, {pipeline_mode = #tpu.pipeline_mode<synchronous>, transform_indices = @transform_5, window_bounds = array<i64: 2, 128>}]} {
    %c0 = arith.constant 0 : index
    %0 = memref.load %arg1[%c0] : memref<2xf32, #tpu.memory_space<smem>>
    %c0_0 = arith.constant 0 : index
    %c0_1 = arith.constant 0 : index
    %1 = vector.load %arg2[%c0_0, %c0_1] : memref<8x32xf32, #tpu.memory_space<vmem>>, vector<8x32xf32>
    %c0_2 = arith.constant 0 : index
    %c0_3 = arith.constant 0 : index
    %2 = vector.load %arg3[%c0_2, %c0_3] : memref<32x128xf32, #tpu.memory_space<vmem>>, vector<32x128xf32>
    %cst = arith.constant dense<0.000000e+00> : vector<8x128xf32>
    %3 = tpu.matmul %1, %2, %cst {dimension_numbers = #tpu.dot_dimension_numbers<[1], [0], [0], [1], [0, 0, 1, 1], [], []>} : vector<8x32xf32>, vector<32x128xf32>, vector<8x128xf32> -> vector<8x128xf32>
    %4 = arith.mulf %1, %1 : vector<8x32xf32>
    %cst_4 = arith.constant dense<0.000000e+00> : vector<8xf32>
    %5 = vector.multi_reduction <add>, %4, %cst_4 [1] : vector<8x32xf32> to vector<8xf32>
    %6 = vector.shape_cast %5 : vector<8xf32> to vector<8x1xf32>
    %7 = vector.broadcast %0 : f32 to vector<8x1xf32>
    %8 = arith.mulf %7, %6 : vector<8x1xf32>
    %cst_5 = arith.constant 1.000000e+00 : f32
    %9 = vector.broadcast %cst_5 : f32 to vector<8x1xf32>
    %10 = arith.subf %9, %8 : vector<8x1xf32>
    %11 = tpu.reciprocal %10 {approx = true} : vector<8x1xf32> -> vector<8x1xf32>
    %12 = arith.mulf %10, %11 : vector<8x1xf32>
    %cst_6 = arith.constant 2.000000e+00 : f32
    %13 = vector.broadcast %cst_6 : f32 to vector<8x1xf32>
    %14 = arith.subf %13, %12 : vector<8x1xf32>
    %15 = arith.mulf %11, %14 : vector<8x1xf32>
    %cst_7 = arith.constant 2.000000e+00 : f32
    %16 = vector.broadcast %cst_7 : f32 to vector<8x1xf32>
    %17 = arith.mulf %16, %15 : vector<8x1xf32>
    %c0_8 = arith.constant 0 : index
    %c0_9 = arith.constant 0 : index
    %18 = vector.load %arg4[%c0_8, %c0_9] : memref<3x128xf32, #tpu.memory_space<vmem>>, vector<1x128xf32>
    %c1 = arith.constant 1 : index
    %c0_10 = arith.constant 0 : index
    %19 = vector.load %arg4[%c1, %c0_10] : memref<3x128xf32, #tpu.memory_space<vmem>>, vector<1x128xf32>
    %c2 = arith.constant 2 : index
    %c0_11 = arith.constant 0 : index
    %20 = vector.load %arg4[%c2, %c0_11] : memref<3x128xf32, #tpu.memory_space<vmem>>, vector<1x128xf32>
    %21 = vector.broadcast %17 : vector<8x1xf32> to vector<8x128xf32>
    %22 = arith.mulf %21, %3 : vector<8x128xf32>
    %23 = vector.broadcast %18 : vector<1x128xf32> to vector<8x128xf32>
    %24 = arith.mulf %22, %23 : vector<8x128xf32>
    %cst_12 = arith.constant 1.000000e+00 : f32
    %25 = vector.broadcast %cst_12 : f32 to vector<8x1xf32>
    %26 = arith.subf %17, %25 : vector<8x1xf32>
    %27 = vector.broadcast %26 : vector<8x1xf32> to vector<8x128xf32>
    %28 = vector.broadcast %19 : vector<1x128xf32> to vector<8x128xf32>
    %29 = arith.mulf %27, %28 : vector<8x128xf32>
    %30 = arith.subf %24, %29 : vector<8x128xf32>
    %31 = arith.mulf %30, %30 : vector<8x128xf32>
    %cst_13 = arith.constant 1.000000e+00 : f32
    %32 = vector.broadcast %cst_13 : f32 to vector<8x128xf32>
    %33 = arith.addf %31, %32 : vector<8x128xf32>
    %34 = math.sqrt %33 : vector<8x128xf32>
    %35 = arith.addf %30, %34 : vector<8x128xf32>
    %36 = math.log %35 : vector<8x128xf32>
    %37 = vector.broadcast %20 : vector<1x128xf32> to vector<8x128xf32>
    %38 = arith.mulf %37, %36 : vector<8x128xf32>
    %cst_14 = arith.constant 0.000000e+00 : f32
    %39 = vector.broadcast %cst_14 : f32 to vector<8x128xf32>
    %40 = arith.maximumf %38, %39 : vector<8x128xf32>
    %c0_15 = arith.constant 0 : index
    %c0_16 = arith.constant 0 : index
    %41 = vector.load %arg5[%c0_15, %c0_16] : memref<8x128xf32, #tpu.memory_space<vmem>>, vector<8x128xf32>
    tpu.vector_store %arg5[%c0_15, %c0_16], %40 {strides = array<i32>} : memref<8x128xf32, #tpu.memory_space<vmem>>, vector<8x128xf32>,
    %c0_i32 = arith.constant 0 : i32
    %42 = arith.cmpi eq, %arg0, %c0_i32 : i32
    %43 = arith.extui %42 : i1 to i32
    %c0_i32_17 = arith.constant 0 : i32
    %44 = arith.cmpi ne, %43, %c0_i32_17 : i32
    scf.if %44 {
      %cst_28 = arith.constant 0.000000e+00 : f32
      %56 = vector.broadcast %cst_28 : f32 to vector<2x128xf32>
      %c0_29 = arith.constant 0 : index
      %c0_30 = arith.constant 0 : index
      %57 = vector.load %arg6[%c0_29, %c0_30] : memref<2x128xf32, #tpu.memory_space<vmem>>, vector<2x128xf32>
      tpu.vector_store %arg6[%c0_29, %c0_30], %56 {strides = array<i32>} : memref<2x128xf32, #tpu.memory_space<vmem>>, vector<2x128xf32>,
    } else {
    }
    %c0_18 = arith.constant 0 : index
    %c0_19 = arith.constant 0 : index
    %45 = vector.load %arg6[%c0_18, %c0_19] : memref<2x128xf32, #tpu.memory_space<vmem>>, vector<1x128xf32>
    %cst_20 = arith.constant dense<0.000000e+00> : vector<128xf32>
    %46 = vector.multi_reduction <add>, %40, %cst_20 [0] : vector<8x128xf32> to vector<128xf32>
    %47 = vector.shape_cast %46 : vector<128xf32> to vector<1x128xf32>
    %48 = arith.addf %45, %47 : vector<1x128xf32>
    %c0_21 = arith.constant 0 : index
    %c0_22 = arith.constant 0 : index
    %49 = vector.load %arg6[%c0_21, %c0_22] : memref<2x128xf32, #tpu.memory_space<vmem>>, vector<1x128xf32>
    tpu.vector_store %arg6[%c0_21, %c0_22], %48 {strides = array<i32>} : memref<2x128xf32, #tpu.memory_space<vmem>>, vector<1x128xf32>,
    %c1_23 = arith.constant 1 : index
    %c0_24 = arith.constant 0 : index
    %50 = vector.load %arg6[%c1_23, %c0_24] : memref<2x128xf32, #tpu.memory_space<vmem>>, vector<1x128xf32>
    %51 = arith.mulf %40, %40 : vector<8x128xf32>
    %cst_25 = arith.constant dense<0.000000e+00> : vector<128xf32>
    %52 = vector.multi_reduction <add>, %51, %cst_25 [0] : vector<8x128xf32> to vector<128xf32>
    %53 = vector.shape_cast %52 : vector<128xf32> to vector<1x128xf32>
    %54 = arith.addf %50, %53 : vector<1x128xf32>
    %c1_26 = arith.constant 1 : index
    %c0_27 = arith.constant 0 : index
    %55 = vector.load %arg6[%c1_26, %c0_27] : memref<2x128xf32, #tpu.memory_space<vmem>>, vector<1x128xf32>
    tpu.vector_store %arg6[%c1_26, %c0_27], %54 {strides = array<i32>} : memref<2x128xf32, #tpu.memory_space<vmem>>, vector<1x128xf32>,
    return
  }
  func.func @transform_0(%arg0: i32) -> i32 {
    %c0_i32 = arith.constant 0 : i32
    %c0_i32_0 = arith.constant 0 : i32
    return %c0_i32 : i32
  }
  func.func @transform_1(%arg0: i32) -> (i32, i32) {
    %c0_i32 = arith.constant 0 : i32
    %c0_i32_0 = arith.constant 0 : i32
    return %arg0, %c0_i32 : i32, i32
  }
  func.func @transform_2(%arg0: i32) -> (i32, i32) {
    %c0_i32 = arith.constant 0 : i32
    %c0_i32_0 = arith.constant 0 : i32
    %c0_i32_1 = arith.constant 0 : i32
    return %c0_i32, %c0_i32_0 : i32, i32
  }
  func.func @transform_3(%arg0: i32) -> (i32, i32) {
    %c0_i32 = arith.constant 0 : i32
    %c0_i32_0 = arith.constant 0 : i32
    %c0_i32_1 = arith.constant 0 : i32
    return %c0_i32, %c0_i32_0 : i32, i32
  }
  func.func @transform_4(%arg0: i32) -> (i32, i32) {
    %c0_i32 = arith.constant 0 : i32
    %c0_i32_0 = arith.constant 0 : i32
    return %arg0, %c0_i32 : i32, i32
  }
  func.func @transform_5(%arg0: i32) -> (i32, i32) {
    %c0_i32 = arith.constant 0 : i32
    %c0_i32_0 = arith.constant 0 : i32
    %c0_i32_1 = arith.constant 0 : i32
    return %c0_i32, %c0_i32_0 : i32, i32
  }
}

</mosaic_0001>

<llo_original>
// kernel: tpu_custom_call.1
$region0: #{tpu_custom_call.1}
  #allocation0 [shape = 'u32[]', space=smem, size = 0x4, offset = 0x4, fixed_abs, tag = 'smem constant byte address 0x4 - core index']
  #allocation1 [shape = 'u32[144,128]{1,0:T(1,128)}', space=vmem, size = 0x12000, scoped, tag = 'internal scratch']
  %s0 = inlined_call_operand.hbm [shape: f32[2], index: 0, kind: input, shape index: {}]
  %s1 = inlined_call_operand.hbm [shape: f32[32,32], index: 1, kind: input, shape index: {}]
  %s2 = inlined_call_operand.hbm [shape: f32[32,128], index: 2, kind: input, shape index: {}]
  %s3 = inlined_call_operand.vmem [shape: f32[3,128], index: 3, kind: input, shape index: {}]
  %s4 = inlined_call_operand.hbm [shape: f32[32,128], index: 4, kind: output, shape index: {0}]
  %s5 = inlined_call_operand.hbm [shape: f32[2,128], index: 5, kind: output, shape index: {1}]
  %6 = xla_tuple %s4, %s5
  %s7 = sld [smem:[#allocation0]]
  $region73: #{tpu_custom_call.1} parent=0
    _
  %s9 = ssub.s32 1, %s7
  %s10 = scalar_select 0, %s9, %s7
  $region1: #{tpu_custom_call.1} parent=0
    #allocation2 [shape = 'u8[512]{0}', space=smem, size = 0x200, scoped, tag = 'input window, operand 0, single buffered']
    #allocation3 [shape = 's32[2]{0}', space=sflag, size = 0x8, scoped, tag = 'scoped memory for tpu_custom_call.1']
    #allocation4 [shape = 's32[2]{0}', space=sflag, size = 0x8, scoped, tag = 'scoped memory for tpu_custom_call.1']
    #allocation5 [shape = 's32[2]{0}', space=sflag, size = 0x8, scoped, tag = 'scoped memory for tpu_custom_call.1']
    #allocation6 [shape = 'u8[8192]{0}', space=vmem, size = 0x2000, scoped, tag = 'input window, operand 1']
    #allocation7 [shape = 'u8[16384]{0}', space=vmem, size = 0x4000, scoped, tag = 'input window, operand 2, single buffered']
    #allocation8 [shape = 's32[1]{0}', space=sflag, size = 0x4, scoped, tag = 'scoped memory for tpu_custom_call.1']
    #allocation9 [shape = 'u8[8192]{0}', space=vmem, size = 0x2000, scoped, tag = 'output window, operand 0']
    #allocation10 [shape = 'u8[1024]{0}', space=vmem, size = 0x400, scoped, tag = 'output window, operand 1, single buffered']
    #allocation11 [shape = 's32[1]{0}', space=sflag, size = 0x4, scoped, tag = 'scoped memory for tpu_custom_call.1']
    %11 = vsyncpa [#allocation5], 0
    %12 = vsyncpa [#allocation3], 0
    %s13 = scalar_lea.sflag [#allocation3], 1
    %14 = vsyncpa %s13, 0
    %15 = vsyncpa [#allocation8], 0
    %16 = vsyncpa [#allocation4], 0
    %s17 = scalar_lea.sflag [#allocation4], 1
    %18 = vsyncpa %s17, 0
    %19 = vsyncpa [#allocation11], 0
    loop: start=0, step=1, limit=6
    $region2: #{tpu_custom_call.1} parent=1 // loop_pre_header
      _
    $region3: #{tpu_custom_call.1} parent=1 // loop_header
      %s21 = sphi 0, %s25
      %p22 = scmp.ge.s32.totalorder %s21, 6
      %s29 = sphi 0, %s29
      %s31 = sphi 0, %s29
      %s32 = sphi 0, %s31
      %s46 = sphi 0, %s32
      %s52 = sphi 0, %s54
      %s55 = sphi 0, %s52
      %s56 = sphi 0, %s55
      %s72 = sphi 0, %s56
      %s76 = sphi 0, %s76
      %s78 = sphi 0, %s76
      %s79 = sphi 0, %s78
      %s93 = sphi 0, %s79
      %s97 = sphi 0, %s97
      %s99 = sphi 0, %s97
      %s100 = sphi 0, %s99
      %s114 = sphi 0, %s100
      %s120 = sphi 0, %s122
      %s123 = sphi 0, %s120
      %s124 = sphi 0, %s123
      %s140 = sphi 0, %s124
      %s144 = sphi 0, %s144
      %s146 = sphi 0, %s144
      %s147 = sphi 0, %s146
      %s161 = sphi 0, %s147
    $region4: #{tpu_custom_call.1} parent=1 // loop_header_branch
      %24 = sbr.rel (%p22) target = $region8
    $region5: #{tpu_custom_call.1} parent=1 // loop_body
      %s26 = ssub.s32 %s21, 1
      %s27 = ssub.s32 %s21, 2
      %s28 = sadd.s32 %s21, 1
      %s30 = sadd.s32 %s29, 1
      %p33 = scmp.eq.s32.totalorder %s21, 3
      %p34 = scmp.ne.s32.totalorder %s29, %s31
      %p35 = scmp.eq.s32.totalorder %s21, 0
      %p36 = por %p34, %p35
      %p37 = scmp.ne.s32.totalorder %s29, %s31
      %p38 = scmp.eq.s32.totalorder %s26, 3
      %p39 = por %p37, %p38
      %p40 = scmp.ne.s32.totalorder %s31, %s32
      %p41 = scmp.eq.s32.totalorder %s26, 0
      %p42 = por %p40, %p41
      %p43 = scmp.ne.s32.totalorder %s31, %s32
      %p44 = scmp.eq.s32.totalorder %s27, 3
      %p45 = por %p43, %p44
      %p47 = scmp.ne.s32.totalorder %s32, %s46
      %p48 = scmp.eq.s32.totalorder %s27, 0
      %p49 = por %p47, %p48
      %s50 = ssub.s32 %s21, %s28
      %p51 = scmp.eq.s32.totalorder %s50, 0
      %s53 = sadd.s32 %s52, 1
      %s54 = scalar_select %p51, %s52, %s53
      %p57 = pneg %p51
      %p58 = scmp.eq.s32.totalorder %s21, 3
      %p59 = por %p57, %p58
      %p60 = scmp.ne.s32.totalorder %s52, %s55
      %p61 = scmp.eq.s32.totalorder %s21, 0
      %p62 = por %p60, %p61
      %p63 = scmp.ne.s32.totalorder %s52, %s55
      %p64 = scmp.eq.s32.totalorder %s26, 3
      %p65 = por %p63, %p64
      %p66 = scmp.ne.s32.totalorder %s55, %s56
      %p67 = scmp.eq.s32.totalorder %s26, 0
      %p68 = por %p66, %p67
      %p69 = scmp.ne.s32.totalorder %s55, %s56
      %p70 = scmp.eq.s32.totalorder %s27, 3
      %p71 = por %p69, %p70
      %p73 = scmp.ne.s32.totalorder %s56, %s72
      %p74 = scmp.eq.s32.totalorder %s27, 0
      %p75 = por %p73, %p74
      %s77 = sadd.s32 %s76, 1
      %p80 = scmp.eq.s32.totalorder %s21, 3
      %p81 = scmp.ne.s32.totalorder %s76, %s78
      %p82 = scmp.eq.s32.totalorder %s21, 0
      %p83 = por %p81, %p82
      %p84 = scmp.ne.s32.totalorder %s76, %s78
      %p85 = scmp.eq.s32.totalorder %s26, 3
      %p86 = por %p84, %p85
      %p87 = scmp.ne.s32.totalorder %s78, %s79
      %p88 = scmp.eq.s32.totalorder %s26, 0
      %p89 = por %p87, %p88
      %p90 = scmp.ne.s32.totalorder %s78, %s79
      %p91 = scmp.eq.s32.totalorder %s27, 3
      %p92 = por %p90, %p91
      %p94 = scmp.ne.s32.totalorder %s79, %s93
      %p95 = scmp.eq.s32.totalorder %s27, 0
      %p96 = por %p94, %p95
      %s98 = sadd.s32 %s97, 1
      %p101 = scmp.eq.s32.totalorder %s21, 3
      %p102 = scmp.ne.s32.totalorder %s97, %s99
      %p103 = scmp.eq.s32.totalorder %s21, 0
      %p104 = por %p102, %p103
      %p105 = scmp.ne.s32.totalorder %s97, %s99
      %p106 = scmp.eq.s32.totalorder %s26, 3
      %p107 = por %p105, %p106
      %p108 = scmp.ne.s32.totalorder %s99, %s100
      %p109 = scmp.eq.s32.totalorder %s26, 0
      %p110 = por %p108, %p109
      %p111 = scmp.ne.s32.totalorder %s99, %s100
      %p112 = scmp.eq.s32.totalorder %s27, 3
      %p113 = por %p111, %p112
      %p115 = scmp.ne.s32.totalorder %s100, %s114
      %p116 = scmp.eq.s32.totalorder %s27, 0
      %p117 = por %p115, %p116
      %s118 = ssub.s32 %s21, %s28
      %p119 = scmp.eq.s32.totalorder %s118, 0
      %s121 = sadd.s32 %s120, 1
      %s122 = scalar_select %p119, %s120, %s121
      %p125 = pneg %p119
      %p126 = scmp.eq.s32.totalorder %s21, 3
      %p127 = por %p125, %p126
      %p128 = scmp.ne.s32.totalorder %s120, %s123
      %p129 = scmp.eq.s32.totalorder %s21, 0
      %p130 = por %p128, %p129
      %p131 = scmp.ne.s32.totalorder %s120, %s123
      %p132 = scmp.eq.s32.totalorder %s26, 3
      %p133 = por %p131, %p132
      %p134 = scmp.ne.s32.totalorder %s123, %s124
      %p135 = scmp.eq.s32.totalorder %s26, 0
      %p136 = por %p134, %p135
      %p137 = scmp.ne.s32.totalorder %s123, %s124
      %p138 = scmp.eq.s32.totalorder %s27, 3
      %p139 = por %p137, %p138
      %p141 = scmp.ne.s32.totalorder %s124, %s140
      %p142 = scmp.eq.s32.totalorder %s27, 0
      %p143 = por %p141, %p142
      %s145 = sadd.s32 %s144, 1
      %p148 = scmp.eq.s32.totalorder %s21, 3
      %p149 = scmp.ne.s32.totalorder %s144, %s146
      %p150 = scmp.eq.s32.totalorder %s21, 0
      %p151 = por %p149, %p150
      %p152 = scmp.ne.s32.totalorder %s144, %s146
      %p153 = scmp.eq.s32.totalorder %s26, 3
      %p154 = por %p152, %p153
      %p155 = scmp.ne.s32.totalorder %s146, %s147
      %p156 = scmp.eq.s32.totalorder %s26, 0
      %p157 = por %p155, %p156
      %p158 = scmp.ne.s32.totalorder %s146, %s147
      %p159 = scmp.eq.s32.totalorder %s27, 3
      %p160 = por %p158, %p159
      %p162 = scmp.ne.s32.totalorder %s147, %s161
      %p163 = scmp.eq.s32.totalorder %s27, 0
      %p164 = por %p162, %p163
      %p165 = scmp.le.s32.totalorder 1, %s21
      %p166 = scmp.lt.s32.totalorder %s21, 5
      %p167 = pnand %p165, %p166
      %p168 = pneg %p167
      // Predicated region
      $region9: #{tpu_custom_call.1} parent=5 // pred_check
        _
      $region10: #{tpu_custom_call.1} parent=5 // pred_check_branch
        %170 = sbr.rel (%p167) target = $region12
      $region11: #{tpu_custom_call.1} parent=5 // pred_region
        %s171 = ssub.s32 %s21, 1
        // Predicated region
        $region13: #{tpu_custom_call.1} parent=11 // pred_check
          %p172 = pneg %p42
        $region14: #{tpu_custom_call.1} parent=11 // pred_check_branch
          %174 = sbr.rel (%p172) target = $region16
        $region15: #{tpu_custom_call.1} parent=11 // pred_region
          %s176 = ssub.s32 16, 16
          %177 = vsyncadd [#allocation5], %s176
          %180 = dma.hbm_to_smem %s0, 16, [#allocation2], [#allocation5]
        $region16: #{tpu_custom_call.1} parent=11 // pred_fallthru
          _
        // Predicated region
        $region17: #{tpu_custom_call.1} parent=11 // pred_check
          %p181 = pneg %p89
        $region18: #{tpu_custom_call.1} parent=11 // pred_check_branch
          %183 = sbr.rel (%p181) target = $region20
        $region19: #{tpu_custom_call.1} parent=11 // pred_region
          %s185 = ssub.s32 512, 512
          %186 = vsyncadd [#allocation8], %s185
          %s187 = sshll.u32 [#allocation7], 4
          %s188 = int_to_ptr.vmem [resolvable:$true] %s187
          %193 = dma.hbm_to_vmem [thread:$0]  %s2, 512, %s188, [#allocation8], 128, 128, 8
        $region20: #{tpu_custom_call.1} parent=11 // pred_fallthru
          _
        // Predicated region
        $region21: #{tpu_custom_call.1} parent=11 // pred_check
          %p194 = pneg %p110
        $region22: #{tpu_custom_call.1} parent=11 // pred_check_branch
          %196 = sbr.rel (%p194) target = $region24
        $region23: #{tpu_custom_call.1} parent=11 // pred_region
          _
        $region24: #{tpu_custom_call.1} parent=11 // pred_fallthru
          _
      $region12: #{tpu_custom_call.1} parent=5 // pred_fallthru
        _
      %p197 = scmp.lt.s32.totalorder %s21, 4
      // Predicated region
      $region25: #{tpu_custom_call.1} parent=5 // pred_check
        %p198 = pneg %p197
      $region26: #{tpu_custom_call.1} parent=5 // pred_check_branch
        %200 = sbr.rel (%p198) target = $region28
      $region27: #{tpu_custom_call.1} parent=5 // pred_region
        // Predicated region
        $region29: #{tpu_custom_call.1} parent=27 // pred_check
          %p201 = pneg %p62
        $region30: #{tpu_custom_call.1} parent=27 // pred_check_branch
          %203 = sbr.rel (%p201) target = $region32
        $region31: #{tpu_custom_call.1} parent=27 // pred_region
          %s204 = sand.u32 %s52, 1
          %s205 = scalar_lea.sflag [#allocation3], %s204
          %s206 = sand.u32 %s52, 1
          %s207 = smul.addr %s206, 8
          %s208 = scalar_lea.vmem [#allocation6], %s207
          %s210 = ssub.s32 128, 128
          %211 = vsyncadd %s205, %s210
          %s212 = smul.addr %s21, 128
          %s213 = scalar_lea.hbm %s1, %s212
          %s215 = sshll.u32 %s208, 4
          %s216 = int_to_ptr.vmem [resolvable:$true] %s215
          %218 = dma.hbm_to_vmem [thread:$0]  %s213, 128, %s216, %s205
        $region32: #{tpu_custom_call.1} parent=27 // pred_fallthru
          _
      $region28: #{tpu_custom_call.1} parent=5 // pred_fallthru
        _
      %p219 = scmp.le.s32.totalorder 1, %s21
      %p220 = scmp.lt.s32.totalorder %s21, 5
      %p221 = pnand %p219, %p220
      %p222 = pneg %p221
      // Predicated region
      $region33: #{tpu_custom_call.1} parent=5 // pred_check
        _
      $region34: #{tpu_custom_call.1} parent=5 // pred_check_branch
        %224 = sbr.rel (%p221) target = $region36
      $region35: #{tpu_custom_call.1} parent=5 // pred_region
        %s225 = ssub.s32 %s21, 1
        // Predicated region
        $region37: #{tpu_custom_call.1} parent=35 // pred_check
          %p226 = pneg %p42
        $region38: #{tpu_custom_call.1} parent=35 // pred_check_branch
          %228 = sbr.rel (%p226) target = $region40
        $region39: #{tpu_custom_call.1} parent=35 // pred_region
          %229 = dma.done [#allocation5], 16
        $region40: #{tpu_custom_call.1} parent=35 // pred_fallthru
          _
        %s230 = sand.u32 %s55, 1
        %s231 = scalar_lea.sflag [#allocation3], %s230
        %s232 = sand.u32 %s55, 1
        %s233 = smul.addr %s232, 8
        %s234 = scalar_lea.vmem [#allocation6], %s233
        // Predicated region
        $region41: #{tpu_custom_call.1} parent=35 // pred_check
          %p235 = pneg %p68
        $region42: #{tpu_custom_call.1} parent=35 // pred_check_branch
          %237 = sbr.rel (%p235) target = $region44
        $region43: #{tpu_custom_call.1} parent=35 // pred_region
          %238 = dma.done %s231, 128
        $region44: #{tpu_custom_call.1} parent=35 // pred_fallthru
          _
        // Predicated region
        $region45: #{tpu_custom_call.1} parent=35 // pred_check
          %p239 = pneg %p89
        $region46: #{tpu_custom_call.1} parent=35 // pred_check_branch
          %241 = sbr.rel (%p239) target = $region48
        $region47: #{tpu_custom_call.1} parent=35 // pred_region
          %242 = dma.done [#allocation8], 512
        $region48: #{tpu_custom_call.1} parent=35 // pred_fallthru
          _
        %243 = sfence
        %p244 = pneg %p42
        %p245 = pneg %p39
        %s246 = sand.u32 %s55, 1
        %s247 = scalar_lea.sflag [#allocation3], %s246
        %s248 = sand.u32 %s55, 1
        %s249 = smul.addr %s248, 8
        %s250 = scalar_lea.vmem [#allocation6], %s249
        %p251 = pneg %p68
        %p252 = pneg %p65
        %p253 = pneg %p89
        %p254 = pneg %p86
        %p255 = pneg %p110
        %p256 = pneg %p107
        %p257 = pneg %p136
        %p258 = pneg %p133
        %s259 = sand.u32 %s123, 1
        %s260 = scalar_lea.sflag [#allocation4], %s259
        %s261 = sand.u32 %s123, 1
        %s262 = smul.addr %s261, 8
        %s263 = scalar_lea.vmem [#allocation9], %s262
        %p264 = pneg %p157
        %p265 = pneg %p154
        %s266 = sld [smem:[#allocation2]]
        %v267 = vld [vmem:[%s234] sm:$0xff]
        %v268 = vld [vmem:[#allocation7] sm:$0xff]
        %v269 = vld [vmem:[#allocation7 + $0x8] sm:$0xff]
        %v270 = vld [vmem:[#allocation7 + $0x10] sm:$0xff]
        %v271 = vld [vmem:[#allocation7 + $0x18] sm:$0xff]
        %vm272 = vcmask 261120
        %v274 = vsel %vm272, %v267, 0
        %276 = vmatprep.subr.mxu0 0.0
        %277 = vmatpush1.msra.mxu0 %v268
        %278 = vmatprep.subr.mxu0 0.0
        %279 = vmatpush1.msra.mxu0 %v269
        %280 = vmatprep.subr.mxu0 0.0
        %281 = vmatpush1.msra.mxu0 %v270
        %282 = vmatprep.subr.mxu0 0.0
        %283 = vmatpush1.msra.mxu0 %v271
        %284 = vmatprep.subr.mxu0 0.0
        %285 = vmatpush1.msra.mxu0 0.0
        %286 = vmatprep.subr.mxu0 0.0
        %287 = vmatpush1.msra.mxu0 0.0
        %288 = vmatprep.subr.mxu0 0.0
        %289 = vmatpush1.msra.mxu0 0.0
        %290 = vmatprep.subr.mxu0 0.0
        %291 = vmatpush1.msra.mxu0 0.0
        %292 = vmatprep.subr.mxu0 0.0
        %293 = vmatpush1.msra.mxu0 0.0
        %294 = vmatprep.subr.mxu0 0.0
        %295 = vmatpush1.msra.mxu0 0.0
        %296 = vmatprep.subr.mxu0 0.0
        %297 = vmatpush1.msra.mxu0 0.0
        %298 = vmatprep.subr.mxu0 0.0
        %299 = vmatpush1.msra.mxu0 0.0
        %300 = vmatprep.subr.mxu0 0.0
        %301 = vmatpush1.msra.mxu0 0.0
        %302 = vmatprep.subr.mxu0 0.0
        %303 = vmatpush1.msra.mxu0 0.0
        %304 = vmatprep.subr.mxu0 0.0
        %305 = vmatpush1.msra.mxu0 0.0
        %306 = vmatprep.subr.mxu0 0.0
        %307 = vmatpush1.msra.mxu0 0.0
        %308 = vmatprep.subr.mxu0 0.0
        %309 = vmatpush1.msra.mxu0 0.0
        %310 = vmatprep.subr.mxu0 0.0
        %311 = vmatpush1.msra.mxu0 0.0
        %312 = vmatprep.subr.mxu0 0.0
        %313 = vmatpush1.msra.mxu0 0.0
        %314 = vmatprep.subr.mxu0 0.0
        %315 = vmatpush1.msra.mxu0 0.0
        %316 = vmatprep.subr.mxu0 0.0
        %317 = vmatpush1.msra.mxu0 0.0
        %318 = vmatprep.subr.mxu0 0.0
        %319 = vmatpush1.msra.mxu0 0.0
        %320 = vmatprep.subr.mxu0 0.0
        %321 = vmatpush1.msra.mxu0 0.0
        %322 = vmatprep.subr.mxu0 0.0
        %323 = vmatpush1.msra.mxu0 0.0
        %324 = vmatprep.subr.mxu0 0.0
        %325 = vmatpush1.msra.mxu0 0.0
        %326 = vmatprep.subr.mxu0 0.0
        %327 = vmatpush1.msra.mxu0 0.0
        %328 = vmatprep.subr.mxu0 0.0
        %329 = vmatpush1.msra.mxu0 0.0
        %330 = vmatprep.subr.mxu0 0.0
        %331 = vmatpush1.msra.mxu0 0.0
        %332 = vmatprep.subr.mxu0 0.0
        %333 = vmatpush1.msra.mxu0 0.0
        %334 = vmatprep.subr.mxu0 0.0
        %335 = vmatpush1.msra.mxu0 0.0
        %336 = vmatprep.subr.mxu0 0.0
        %337 = vmatpush1.msra.mxu0 0.0
        %338 = vmatprep.subr.mxu0 0.0
        %339 = vmatpush1.msra.mxu0 0.0
        %340 = vmatprep.mubr.f32.mxu0 0.0
        %341 = vmatmul.mubr.f32.gmra.mrb[0].mxu0 %v274
        %v342 = vpop.f32.mrb[0].mxu0
        %v343 = vadd.f32 0.0, %v342
        %v344 = vpop.f32.mrb[0].mxu0
        %345 = vdwg.mxu0
        %v346 = vmul.f32 %v267, %v267
        %v347 = vsel %vm272, %v346, 0.0
        %348 = vadd.xlane.f32.xlu0 %v347
        %v349 = vpop.xlane.xlu0 %348
        %v350 = vstv %s266
        %v351 = vmul.f32 %v350, %v349
        %v352 = vsub.f32 1.0, %v351
        %v353 = vrcp.pop %v352
        %v354 = vmul.f32 %v352, %v353
        %v355 = vsub.f32 2.0, %v354
        %v356 = vmul.f32 %v353, %v355
        %v357 = vmul.f32 %v356, 2.0
        %v358 = vld [vmem:[%s3] sm:$0x1]
        %v359 = vld [vmem:[%s3 + $0x1] sm:$0x1]
        %v360 = vld [vmem:[%s3 + $0x2] sm:$0x1]
        %v361 = vmul.f32 %v357, %v343
        %v362 = vlaneseq
        %v363 = vshrl.u32 %v362, 7
        %v364 = vsub.s32 0, %v363
        %v365 = vrot.slane %v358, %v364
        %v366 = vmul.f32 %v361, %v365
        %v367 = vsub.f32 %v357, 1.0
        %v368 = vlaneseq
        %v369 = vshrl.u32 %v368, 7
        %v370 = vsub.s32 0, %v369
        %v371 = vrot.slane %v359, %v370
        %v372 = vmul.f32 %v367, %v371
        %v373 = vsub.f32 %v366, %v372
        %v374 = vmul.f32 %v373, %v373
        %v375 = vadd.f32 %v374, 1.0
        %v376 = vrsqrt.pop %v375
        %v377 = vmul.f32 %v375, %v376
        %vm378 = vcmp.eq.f32.partialorder %v375, inf
        %v379 = vsel %vm378, %v375, %v377
        %vm380 = vcmp.eq.f32.partialorder %v375, 0.0
        %v381 = vand.u32 %v375, 2147483648
        %v382 = vsel %vm380, %v381, %v379
        %v383 = vadd.f32 %v373, %v382
        %v384 = vlog2.pop %v383
        %v385 = vmul.f32 %v384, 0.6931472
        %v386 = vlaneseq
        %v387 = vshrl.u32 %v386, 7
        %v388 = vsub.s32 0, %v387
        %v389 = vrot.slane %v360, %v388
        %v390 = vmul.f32 %v389, %v385
        %v391 = vmax.f32 %v390, 0.0
        %392 = vst [vmem:[%s263] sm:$0xff] %v391
        %p393 = scmp.eq.s32.totalorder %s26, 0
        // Predicated region
        $region49: #{tpu_custom_call.1} parent=35 // pred_check
          %p394 = pneg %p393
        $region50: #{tpu_custom_call.1} parent=35 // pred_check_branch
          %396 = sbr.rel (%p394) target = $region52
        $region51: #{tpu_custom_call.1} parent=35 // pred_region
          %397 = vst [vmem:[#allocation10] sm:$0x3] 0.0
        $region52: #{tpu_custom_call.1} parent=35 // pred_fallthru
          _
        %v398 = vld [vmem:[#allocation10] sm:$0x1]
        %v399 = vrot.slane %v391, 4
        %v400 = vadd.f32 %v391, %v399
        %v401 = vrot.slane %v400, 2
        %v402 = vadd.f32 %v400, %v401
        %v403 = vrot.slane %v402, 1
        %v404 = vadd.f32 %v402, %v403
        %v405 = vadd.f32 %v398, %v404
        %406 = vst [vmem:[#allocation10] sm:$0x1] %v405
        %v407 = vld [vmem:[#allocation10 + $0x1] sm:$0x1]
        %v408 = vmul.f32 %v391, %v391
        %v409 = vrot.slane %v408, 4
        %v410 = vadd.f32 %v408, %v409
        %v411 = vrot.slane %v410, 2
        %v412 = vadd.f32 %v410, %v411
        %v413 = vrot.slane %v412, 1
        %v414 = vadd.f32 %v412, %v413
        %v415 = vadd.f32 %v407, %v414
        %416 = vst [vmem:[#allocation10 + $0x1] sm:$0x1] %v415
        %s417 = sand.u32 %s123, 1
        %s418 = scalar_lea.sflag [#allocation4], %s417
        %s419 = sand.u32 %s123, 1
        %s420 = smul.addr %s419, 8
        %s421 = scalar_lea.vmem [#allocation9], %s420
        // Predicated region
        $region53: #{tpu_custom_call.1} parent=35 // pred_check
          %p422 = pneg %p133
        $region54: #{tpu_custom_call.1} parent=35 // pred_check_branch
          %424 = sbr.rel (%p422) target = $region56
        $region55: #{tpu_custom_call.1} parent=35 // pred_region
          %s426 = ssub.s32 128, 128
          %427 = vsyncadd %s418, %s426
          %s428 = smul.addr %s26, 128
          %s429 = scalar_lea.hbm %s4, %s428
          %s431 = sshll.u32 %s421, 4
          %s432 = int_to_ptr.vmem [resolvable:$true] %s431
          %434 = dma.vmem_to_hbm [thread:$0]  %s432, 128, %s429, %s418
        $region56: #{tpu_custom_call.1} parent=35 // pred_fallthru
          _
        // Predicated region
        $region57: #{tpu_custom_call.1} parent=35 // pred_check
          %p435 = pneg %p154
        $region58: #{tpu_custom_call.1} parent=35 // pred_check_branch
          %437 = sbr.rel (%p435) target = $region60
        $region59: #{tpu_custom_call.1} parent=35 // pred_region
          %s439 = ssub.s32 32, 32
          %440 = vsyncadd [#allocation11], %s439
          %s442 = sshll.u32 [#allocation10], 4
          %s443 = int_to_ptr.vmem [resolvable:$true] %s442
          %445 = dma.vmem_to_hbm [thread:$0]  %s443, 32, %s5, [#allocation11]
        $region60: #{tpu_custom_call.1} parent=35 // pred_fallthru
          _
        // Predicated region
        $region61: #{tpu_custom_call.1} parent=35 // pred_check
          %p446 = pneg %p154
        $region62: #{tpu_custom_call.1} parent=35 // pred_check_branch
          %448 = sbr.rel (%p446) target = $region64
        $region63: #{tpu_custom_call.1} parent=35 // pred_region
          %449 = dma.done [#allocation11], 32
        $region64: #{tpu_custom_call.1} parent=35 // pred_fallthru
          _
      $region36: #{tpu_custom_call.1} parent=5 // pred_fallthru
        _
      %p450 = scmp.le.s32.totalorder 2, %s21
      // Predicated region
      $region65: #{tpu_custom_call.1} parent=5 // pred_check
        %p451 = pneg %p450
      $region66: #{tpu_custom_call.1} parent=5 // pred_check_branch
        %453 = sbr.rel (%p451) target = $region68
      $region67: #{tpu_custom_call.1} parent=5 // pred_region
        %s454 = ssub.s32 %s21, 2
        // Predicated region
        $region69: #{tpu_custom_call.1} parent=67 // pred_check
          %p455 = pneg %p139
        $region70: #{tpu_custom_call.1} parent=67 // pred_check_branch
          %457 = sbr.rel (%p455) target = $region72
        $region71: #{tpu_custom_call.1} parent=67 // pred_region
          %s458 = sand.u32 %s124, 1
          %s459 = scalar_lea.sflag [#allocation4], %s458
          %s460 = sand.u32 %s124, 1
          %s461 = smul.addr %s460, 8
          %s462 = scalar_lea.vmem [#allocation9], %s461
          %463 = dma.done %s459, 128
        $region72: #{tpu_custom_call.1} parent=67 // pred_fallthru
          _
      $region68: #{tpu_custom_call.1} parent=5 // pred_fallthru
        _
    $region6: #{tpu_custom_call.1} parent=1 // loop_footer
      %s25 = sadd.s32 1, %s21
    $region7: #{tpu_custom_call.1} parent=1 // loop_footer_branch
      %20 = sbr.rel target = $region3
    $region8: #{tpu_custom_call.1} parent=1 // loop_exit
      _
    %464 = vsyncpa [#allocation3], 1
    %s465 = scalar_lea.sflag [#allocation3], 1
    %466 = vsyncpa %s465, 1
    %467 = vsyncpa [#allocation8], 1
    %468 = vsyncpa [#allocation4], 1
    %s469 = scalar_lea.sflag [#allocation4], 1
    %470 = vsyncpa %s469, 1
    %471 = vsyncpa [#allocation11], 1
    %472 = vsyncpa [#allocation5], 1
    %s473 = scalar_lea.sflag [#allocation5], 1
    %474 = vsyncpa %s473, 1

</llo_original>
